<compile_context>
chip_gen: v7x
topology: tpu7x:2x2x1
jax: 0.10.0
libtpu: 0.0.40
codegen_flags: <defaults>
</compile_context>

<pallas_src>
import functools

import jax
import jax.numpy as jnp
from jax import lax
from jax.experimental import pallas as pl
from jax.experimental.pallas import tpu as pltpu

_LANES = 128
_SUBLANES = 8


def _tensorcore_count():
    """Best-effort TensorCores-per-chip (1 on v5e/v6e, 2 on v7x)."""
    try:
        info = pltpu.get_tpu_info()
    except Exception:
        return 1
    for name in ("num_tensorcores", "num_tensorcores_per_chip", "num_cores",
                 "tensorcores_per_chip", "core_count"):
        v = getattr(info, name, None)
        if isinstance(v, int) and v > 0:
            return v
    return 1


def _focal_loss_kernel(score_ref, label_ref, out_ref, *,
                       alpha, gamma, tile_rows, chunk_rows, tiles_per_shard,
                       full_rows, rem, needs_mask, first_edge_tile,
                       binary_labels):
    shard = pl.program_id(0)   # "parallel" axis (TensorCores on v7x)
    step = pl.program_id(1)    # "arbitrary" reduction axis

    @pl.when(step == 0)
    def _():
        out_ref[...] = jnp.zeros_like(out_ref)

    n_chunks = tile_rows // chunk_rows
    tile_idx = shard * tiles_per_shard + step

    def chunk_partial(c, masked):
        start = c * chunk_rows
        if not isinstance(start, int):
            start = pl.multiple_of(start, chunk_rows)
        s = score_ref[pl.ds(start, chunk_rows), :].astype(jnp.float32)
        y = label_ref[pl.ds(start, chunk_rows), :].astype(jnp.float32)

        d = s - y
        g = float(gamma)
        if g == int(g) and 0 < int(g) <= 8:
            # Small integer gamma: repeated VPU multiplies, no EUP pow.
            w = d
            for _ in range(int(g) - 1):
                w = w * d
        else:
            # TODO(synk): like torch.pow, negative**non-integer yields NaN here.
            w = jnp.power(d, g)

        if alpha > 0:
            w = w * (alpha * y + (1.0 - alpha) * (1.0 - y))

        # F.binary_cross_entropy clamps the log terms at -100.
        if binary_labels:
            # Hard {0,1} labels only: one EUP log per element instead of two.
            log_t = jnp.maximum(jnp.log(jnp.where(y >= 0.5, s, 1.0 - s)), -100.0)
            contrib = w * -log_t
        else:
            log_s = jnp.maximum(jnp.log(s), -100.0)
            log_1ms = jnp.maximum(jnp.log(1.0 - s), -100.0)
            contrib = w * -(y * log_s + (1.0 - y) * log_1ms)

        if masked:
            grow = (tile_idx * tile_rows + start
                    + lax.broadcasted_iota(jnp.int32, contrib.shape, 0))
            if rem == 0:
                mask = grow < full_rows
            else:
                lane = lax.broadcasted_iota(jnp.int32, contrib.shape, 1)
                mask = (grow < full_rows) | ((grow == full_rows) & (lane < rem))
            # Keep the SELECT form: garbage past the data can be NaN after log.
            contrib = jnp.where(mask, contrib, 0.0)

        # Sublane-preserving partial sum into one (8,128) vreg (pure VPU adds).
        return contrib.reshape(chunk_rows // _SUBLANES, _SUBLANES, _LANES).sum(axis=0)

    def accumulate(masked):
        if n_chunks == 1:
            out_ref[...] += chunk_partial(0, masked)
        else:
            acc = lax.fori_loop(
                0, n_chunks,
                lambda c, a: a + chunk_partial(c, masked),
                jnp.zeros((_SUBLANES, _LANES), jnp.float32),
                unroll=True)
            out_ref[...] += acc

    if not needs_mask:
        accumulate(False)
    else:
        # Only the single ragged edge tile pays the iota/compare/select cost.
        @pl.when(tile_idx < first_edge_tile)
        def _():
            accumulate(False)

        @pl.when(tile_idx >= first_edge_tile)
        def _():
            accumulate(True)


def focal_loss(score, label, alpha=0.25, gamma=2.0, *,
               tile_rows=4096, chunk_rows=512, num_shards=None,
               binary_labels=False):
    """Pallas TPU FocalLoss forward (reduction='sum'). Returns scalar f32.

    Inputs are streamed in their native dtype (bf16 score/label halve HBM
    bytes); the f32 widen happens on the VPU in-kernel. `binary_labels=True`
    is an optional fast path for hard {0,1} labels only (one log/element).
    """
    flat_s = score.reshape(-1)   # keep native dtypes; cast in-kernel
    flat_l = label.reshape(-1)
    n = flat_s.shape[0]

    block_elems = _SUBLANES * _LANES  # 1024
    n_pad = ((n + block_elems - 1) // block_elems) * block_elems
    if n_pad != n:
        # Only awkward sizes pay a pad copy; the padded tail is masked in-kernel.
        flat_s = jnp.pad(flat_s, (0, n_pad - n))
        flat_l = jnp.pad(flat_l, (0, n_pad - n))

    rows = n_pad // _LANES               # multiple of 8 by construction
    s2 = flat_s.reshape(rows, _LANES)    # layout-preserving reshape (free)
    l2 = flat_l.reshape(rows, _LANES)

    # Tile / chunk sizing: big lane-dense DMA tiles, vreg-scale compute chunks.
    tile_rows = max(_SUBLANES, (min(int(tile_rows), rows) // _SUBLANES) * _SUBLANES)
    chunk_rows = max(_SUBLANES, (min(int(chunk_rows), tile_rows) // _SUBLANES) * _SUBLANES)
    tile_rows = max(chunk_rows, (tile_rows // chunk_rows) * chunk_rows)

    num_tiles = pl.cdiv(rows, tile_rows)
    if num_shards is None:
        num_shards = _tensorcore_count()          # 1 on single-TC v5e/v6e
    num_shards = max(1, min(int(num_shards), num_tiles))
    while num_tiles % num_shards:                 # avoid clamped duplicate tiles
        num_shards -= 1
    tiles_per_shard = num_tiles // num_shards

    tile_elems = tile_rows * _LANES
    needs_mask = num_tiles * tile_elems != n
    first_edge_tile = n // tile_elems             # only the last tile is ragged
    full_rows, rem = divmod(n, _LANES)

    # Explicit scoped-VMEM budget: 2 inputs x 2 buffers x tile plus headroom,
    # capped well under v7x's 64 MiB physical VMEM per TensorCore.
    in_tile_bytes = tile_rows * _LANES * (s2.dtype.itemsize + l2.dtype.itemsize)
    vmem_limit_bytes = int(min(64 << 20, max(32 << 20, 5 * in_tile_bytes)))

    kernel = functools.partial(
        _focal_loss_kernel,
        alpha=float(alpha), gamma=float(gamma),
        tile_rows=tile_rows, chunk_rows=chunk_rows,
        tiles_per_shard=tiles_per_shard,
        full_rows=full_rows, rem=rem,
        needs_mask=needs_mask, first_edge_tile=first_edge_tile,
        binary_labels=bool(binary_labels))

    def in_index_map(s, i):
        return (s * tiles_per_shard + i, 0)

    partials = pl.pallas_call(
        kernel,
        out_shape=jax.ShapeDtypeStruct((num_shards * _SUBLANES, _LANES),
                                       jnp.float32),
        grid_spec=pltpu.PrefetchScalarGridSpec(
            num_scalar_prefetch=0,
            grid=(num_shards, tiles_per_shard),
            in_specs=[
                pl.BlockSpec((tile_rows, _LANES), in_index_map),
                pl.BlockSpec((tile_rows, _LANES), in_index_map),
            ],
            out_specs=pl.BlockSpec((_SUBLANES, _LANES), lambda s, i: (s, 0)),
        ),
        compiler_params=pltpu.CompilerParams(
            dimension_semantics=("parallel", "arbitrary"),
            vmem_limit_bytes=vmem_limit_bytes,
        ),
    )(s2, l2)

    # Single tiny cross-lane reduction of the per-shard partial sums.
    return jnp.sum(partials)


def focal_loss_ref(score, label, alpha=0.25, gamma=2.0):
    s = score.astype(jnp.float32)
    y = label.astype(jnp.float32)
    d = s - y
    w = d * d if float(gamma) == 2.0 else jnp.power(d, gamma)
    if alpha > 0:
        w = w * (alpha * y + (1.0 - alpha) * (1.0 - y))
    bce = -(y * jnp.maximum(jnp.log(s), -100.0)
            + (1.0 - y) * jnp.maximum(jnp.log(1.0 - s), -100.0))
    return jnp.sum(w * bce)


if __name__ == "__main__":
    key = jax.random.PRNGKey(0)
    k1, k2, k3, k4 = jax.random.split(key, 4)

    # Main case: NCHW, post-sigmoid scores, binary labels.
    shape = (2, 4, 16, 16)
    score = jax.nn.sigmoid(jax.random.normal(k1, shape, dtype=jnp.float32))
    label = jax.random.bernoulli(k2, p=0.3, shape=shape).astype(jnp.float32)
    ref = focal_loss_ref(score, label, alpha=0.25, gamma=2.0)

    loss = jax.block_until_ready(focal_loss(score, label, alpha=0.25, gamma=2.0))
    assert jnp.allclose(loss, ref, rtol=1e-5, atol=1e-4), (loss, ref)

    # Multi-step accumulation on one shard, and the 2-shard "parallel" split.
    loss_a = jax.block_until_ready(
        focal_loss(score, label, tile_rows=8, chunk_rows=8, num_shards=1))
    loss_b = jax.block_until_ready(
        focal_loss(score, label, tile_rows=8, chunk_rows=8, num_shards=2))
    assert jnp.allclose(loss_a, ref, rtol=1e-5, atol=1e-4), (loss_a, ref)
    assert jnp.allclose(loss_b, ref, rtol=1e-5, atol=1e-4), (loss_b, ref)

    # Ragged element count (not a multiple of 8*128): padded + masked edge tile.
    shape3 = (2, 3, 7, 9)
    score3 = jax.nn.sigmoid(jax.random.normal(k3, shape3, dtype=jnp.float32))
    label3 = jax.random.bernoulli(k4, p=0.3, shape=shape3).astype(jnp.float32)
    ref3 = focal_loss_ref(score3, label3)
    loss3 = jax.block_until_ready(focal_loss(score3, label3))
    assert jnp.allclose(loss3, ref3, rtol=1e-5, atol=1e-4), (loss3, ref3)

    # Partial last tile (rows % tile_rows != 0) + chunked fori_loop tile body.
    shape4 = (3, 8, 128)
    score4 = jax.nn.sigmoid(jax.random.normal(k1, shape4, dtype=jnp.float32))
    label4 = jax.random.bernoulli(k2, p=0.3, shape=shape4).astype(jnp.float32)
    ref4 = focal_loss_ref(score4, label4)
    loss4 = jax.block_until_ready(
        focal_loss(score4, label4, tile_rows=16, chunk_rows=8, num_shards=1))
    assert jnp.allclose(loss4, ref4, rtol=1e-5, atol=1e-4), (loss4, ref4)

    # bf16 input path (half the HBM bytes; kernel widens to f32 on the VPU).
    score_bf = score.astype(jnp.bfloat16)
    label_bf = label.astype(jnp.bfloat16)
    ref_bf = focal_loss_ref(score_bf, label_bf)
    loss_bf = jax.block_until_ready(focal_loss(score_bf, label_bf))
    assert jnp.allclose(loss_bf, ref_bf, rtol=1e-4, atol=1e-3), (loss_bf, ref_bf)

    # Hard-label fast path: one log per element instead of two (exact for {0,1}).
    loss_bin = jax.block_until_ready(
        focal_loss(score, label, binary_labels=True))
    assert jnp.allclose(loss_bin, ref, rtol=1e-5, atol=1e-4), (loss_bin, ref)

    print("KERNEL_OK")
</pallas_src>

<mosaic_0001>
module attributes {stable_mosaic.version = 11 : i64} {
  func.func @_focal_loss_kernel(%arg0: i32, %arg1: i32, %arg2: memref<16x128xf32, #tpu.memory_space<vmem>>, %arg3: memref<16x128xf32, #tpu.memory_space<vmem>>, %arg4: memref<8x128xf32, #tpu.memory_space<vmem>>) attributes {dimension_semantics = [#tpu.dimension_semantics<parallel>, #tpu.dimension_semantics<arbitrary>], iteration_bounds = array<i64: 1, 1>, scalar_prefetch = 0 : i64, scratch_operands = 0 : i64, tpu.core_type = #tpu.core_type<tc>, window_params = [{transform_indices = @transform_0, window_bounds = array<i64: 16, 128>}, {transform_indices = @transform_1, window_bounds = array<i64: 16, 128>}, {transform_indices = @transform_2, window_bounds = array<i64: 8, 128>}]} {
    %c0_i32 = arith.constant 0 : i32
    %0 = arith.cmpi eq, %arg1, %c0_i32 : i32
    %1 = arith.extui %0 : i1 to i32
    %c0_i32_0 = arith.constant 0 : i32
    %2 = arith.cmpi ne, %1, %c0_i32_0 : i32
    scf.if %2 {
      %cst_16 = arith.constant 0.000000e+00 : f32
      %36 = vector.broadcast %cst_16 : f32 to vector<8x128xf32>
      %c0_17 = arith.constant 0 : index
      %c0_18 = arith.constant 0 : index
      %37 = vector.load %arg4[%c0_17, %c0_18] : memref<8x128xf32, #tpu.memory_space<vmem>>, vector<8x128xf32>
      tpu.vector_store %arg4[%c0_17, %c0_18], %36 {strides = array<i32>} : memref<8x128xf32, #tpu.memory_space<vmem>>, vector<8x128xf32>,
    } else {
    }
    %c0 = arith.constant 0 : index
    %c0_1 = arith.constant 0 : index
    %3 = vector.load %arg4[%c0, %c0_1] : memref<8x128xf32, #tpu.memory_space<vmem>>, vector<8x128xf32>
    %c0_2 = arith.constant 0 : index
    %c0_3 = arith.constant 0 : index
    %4 = vector.load %arg2[%c0_2, %c0_3] : memref<16x128xf32, #tpu.memory_space<vmem>>, vector<16x128xf32>
    %c0_4 = arith.constant 0 : index
    %c0_5 = arith.constant 0 : index
    %5 = vector.load %arg3[%c0_4, %c0_5] : memref<16x128xf32, #tpu.memory_space<vmem>>, vector<16x128xf32>
    %6 = arith.subf %4, %5 : vector<16x128xf32>
    %7 = arith.mulf %6, %6 : vector<16x128xf32>
    %cst = arith.constant 2.500000e-01 : f32
    %8 = vector.broadcast %cst : f32 to vector<16x128xf32>
    %9 = arith.mulf %8, %5 : vector<16x128xf32>
    %cst_6 = arith.constant 1.000000e+00 : f32
    %10 = vector.broadcast %cst_6 : f32 to vector<16x128xf32>
    %11 = arith.subf %10, %5 : vector<16x128xf32>
    %cst_7 = arith.constant 7.500000e-01 : f32
    %12 = vector.broadcast %cst_7 : f32 to vector<16x128xf32>
    %13 = arith.mulf %12, %11 : vector<16x128xf32>
    %14 = arith.addf %9, %13 : vector<16x128xf32>
    %15 = arith.mulf %7, %14 : vector<16x128xf32>
    %16 = math.log %4 : vector<16x128xf32>
    %cst_8 = arith.constant -1.000000e+02 : f32
    %17 = vector.broadcast %cst_8 : f32 to vector<16x128xf32>
    %18 = arith.maximumf %16, %17 : vector<16x128xf32>
    %cst_9 = arith.constant 1.000000e+00 : f32
    %19 = vector.broadcast %cst_9 : f32 to vector<16x128xf32>
    %20 = arith.subf %19, %4 : vector<16x128xf32>
    %21 = math.log %20 : vector<16x128xf32>
    %cst_10 = arith.constant -1.000000e+02 : f32
    %22 = vector.broadcast %cst_10 : f32 to vector<16x128xf32>
    %23 = arith.maximumf %21, %22 : vector<16x128xf32>
    %24 = arith.mulf %5, %18 : vector<16x128xf32>
    %cst_11 = arith.constant 1.000000e+00 : f32
    %25 = vector.broadcast %cst_11 : f32 to vector<16x128xf32>
    %26 = arith.subf %25, %5 : vector<16x128xf32>
    %27 = arith.mulf %26, %23 : vector<16x128xf32>
    %28 = arith.addf %24, %27 : vector<16x128xf32>
    %cst_12 = arith.constant 0.000000e+00 : f32
    %29 = vector.broadcast %cst_12 : f32 to vector<16x128xf32>
    %30 = arith.subf %29, %28 : vector<16x128xf32>
    %31 = arith.mulf %15, %30 : vector<16x128xf32>
    %32 = vector.shape_cast %31 : vector<16x128xf32> to vector<2x8x128xf32>
    %cst_13 = arith.constant dense<0.000000e+00> : vector<8x128xf32>
    %33 = vector.multi_reduction <add>, %32, %cst_13 [0] : vector<2x8x128xf32> to vector<8x128xf32>
    %34 = arith.addf %3, %33 : vector<8x128xf32>
    %c0_14 = arith.constant 0 : index
    %c0_15 = arith.constant 0 : index
    %35 = vector.load %arg4[%c0_14, %c0_15] : memref<8x128xf32, #tpu.memory_space<vmem>>, vector<8x128xf32>
    tpu.vector_store %arg4[%c0_14, %c0_15], %34 {strides = array<i32>} : memref<8x128xf32, #tpu.memory_space<vmem>>, vector<8x128xf32>,
    return
  }
  func.func @transform_0(%arg0: i32, %arg1: i32) -> (i32, i32) {
    %c1_i32 = arith.constant 1 : i32
    %0 = arith.muli %arg0, %c1_i32 : i32
    %1 = arith.addi %0, %arg1 : i32
    %c0_i32 = arith.constant 0 : i32
    %c0_i32_0 = arith.constant 0 : i32
    return %1, %c0_i32 : i32, i32
  }
  func.func @transform_1(%arg0: i32, %arg1: i32) -> (i32, i32) {
    %c1_i32 = arith.constant 1 : i32
    %0 = arith.muli %arg0, %c1_i32 : i32
    %1 = arith.addi %0, %arg1 : i32
    %c0_i32 = arith.constant 0 : i32
    %c0_i32_0 = arith.constant 0 : i32
    return %1, %c0_i32 : i32, i32
  }
  func.func @transform_2(%arg0: i32, %arg1: i32) -> (i32, i32) {
    %c0_i32 = arith.constant 0 : i32
    %c0_i32_0 = arith.constant 0 : i32
    return %arg0, %c0_i32 : i32, i32
  }
}

</mosaic_0001>

<llo_original>
// kernel: tpu_custom_call.1
$region0: #{tpu_custom_call.1}
  #allocation0 [shape = 'u32[]', space=smem, size = 0x4, offset = 0x4, fixed_abs, tag = 'smem constant byte address 0x4 - core index']
  #allocation1 [shape = 'u32[144,128]{1,0:T(1,128)}', space=vmem, size = 0x12000, scoped, tag = 'internal scratch']
  %s0 = inlined_call_operand.hbm [shape: f32[16,128], index: 0, kind: input, shape index: {}]
  %s1 = inlined_call_operand.hbm [shape: f32[16,128], index: 1, kind: input, shape index: {}]
  %s2 = inlined_call_operand.hbm [shape: f32[8,128], index: 2, kind: output, shape index: {}]
  %s3 = sld [smem:[#allocation0]]
  $region30: #{tpu_custom_call.1} parent=0
    _
  %s5 = ssub.s32 1, %s3
  %s6 = scalar_select 0, %s5, %s3
  $region1: #{tpu_custom_call.1} parent=0
    #allocation2 [shape = 'u8[8192]{0}', space=vmem, size = 0x2000, scoped, tag = 'input window, operand 0, single buffered']
    #allocation3 [shape = 's32[1]{0}', space=sflag, size = 0x4, scoped, tag = 'scoped memory for tpu_custom_call.1']
    #allocation4 [shape = 's32[1]{0}', space=sflag, size = 0x4, scoped, tag = 'scoped memory for tpu_custom_call.1']
    #allocation5 [shape = 'u8[8192]{0}', space=vmem, size = 0x2000, scoped, tag = 'input window, operand 1, single buffered']
    #allocation6 [shape = 's32[1]{0}', space=sflag, size = 0x4, scoped, tag = 'scoped memory for tpu_custom_call.1']
    #allocation7 [shape = 'u8[4096]{0}', space=vmem, size = 0x1000, scoped, tag = 'output window, operand 0, single buffered']
    %7 = vsyncpa [#allocation3], 0
    %8 = vsyncpa [#allocation6], 0
    %9 = vsyncpa [#allocation4], 0
    // Predicated region
    $region2: #{tpu_custom_call.1} parent=1 // pred_check
      _
    $region3: #{tpu_custom_call.1} parent=1 // pred_check_branch
      %11 = sbr.rel (0) target = $region5
    $region4: #{tpu_custom_call.1} parent=1 // pred_region
      %s12 = sadd.s32 0, 0
      %s13 = smul.u32 2, %s12
      %s15 = ssub.s32 256, 256
      %16 = vsyncadd [#allocation3], %s15
      %s17 = smul.addr %s13, 128
      %s18 = scalar_lea.hbm %s0, %s17
      %s19 = sshll.u32 [#allocation2], 4
      %s20 = int_to_ptr.vmem [resolvable:$true] %s19
      %25 = dma.hbm_to_vmem [thread:$0]  %s18, 256, %s20, [#allocation3], 128, 128, 8
    $region5: #{tpu_custom_call.1} parent=1 // pred_fallthru
      _
    // Predicated region
    $region6: #{tpu_custom_call.1} parent=1 // pred_check
      _
    $region7: #{tpu_custom_call.1} parent=1 // pred_check_branch
      %27 = sbr.rel (0) target = $region9
    $region8: #{tpu_custom_call.1} parent=1 // pred_region
      %s28 = sadd.s32 0, 0
      %s29 = smul.u32 2, %s28
      %s31 = ssub.s32 256, 256
      %32 = vsyncadd [#allocation6], %s31
      %s33 = smul.addr %s29, 128
      %s34 = scalar_lea.hbm %s1, %s33
      %s35 = sshll.u32 [#allocation5], 4
      %s36 = int_to_ptr.vmem [resolvable:$true] %s35
      %41 = dma.hbm_to_vmem [thread:$0]  %s34, 256, %s36, [#allocation6], 128, 128, 8
    $region9: #{tpu_custom_call.1} parent=1 // pred_fallthru
      _
    // Predicated region
    $region10: #{tpu_custom_call.1} parent=1 // pred_check
      _
    $region11: #{tpu_custom_call.1} parent=1 // pred_check_branch
      %43 = sbr.rel (0) target = $region13
    $region12: #{tpu_custom_call.1} parent=1 // pred_region
      %44 = dma.done [#allocation3], 256
    $region13: #{tpu_custom_call.1} parent=1 // pred_fallthru
      _
    // Predicated region
    $region14: #{tpu_custom_call.1} parent=1 // pred_check
      _
    $region15: #{tpu_custom_call.1} parent=1 // pred_check_branch
      %46 = sbr.rel (0) target = $region17
    $region16: #{tpu_custom_call.1} parent=1 // pred_region
      %47 = dma.done [#allocation6], 256
    $region17: #{tpu_custom_call.1} parent=1 // pred_fallthru
      _
    %s48 = sadd.s32 0, 0
    %s49 = smul.u32 2, %s48
    %s50 = sadd.s32 0, 0
    %s51 = smul.u32 2, %s50
    %p52 = scmp.eq.s32.totalorder 0, 0
    // Predicated region
    $region18: #{tpu_custom_call.1} parent=1 // pred_check
      %p53 = pneg %p52
    $region19: #{tpu_custom_call.1} parent=1 // pred_check_branch
      %55 = sbr.rel (%p53) target = $region21
    $region20: #{tpu_custom_call.1} parent=1 // pred_region
      %56 = vst [vmem:[#allocation7] sm:$0xff] 0.0
    $region21: #{tpu_custom_call.1} parent=1 // pred_fallthru
      _
    %v57 = vld [vmem:[#allocation7] sm:$0xff]
    %v58 = vld [vmem:[#allocation2] sm:$0xff]
    %v59 = vld [vmem:[#allocation2 + $0x8] sm:$0xff]
    %v60 = vld [vmem:[#allocation5] sm:$0xff]
    %v61 = vld [vmem:[#allocation5 + $0x8] sm:$0xff]
    %v62 = vsub.f32 %v58, %v60
    %v63 = vsub.f32 %v59, %v61
    %v64 = vmul.f32 %v62, %v62
    %v65 = vmul.f32 %v63, %v63
    %v66 = vmul.f32 %v60, 0.25
    %v67 = vmul.f32 %v61, 0.25
    %v68 = vsub.f32 1.0, %v60
    %v69 = vsub.f32 1.0, %v61
    %v70 = vmul.f32 %v68, 0.75
    %v71 = vmul.f32 %v69, 0.75
    %v72 = vadd.f32 %v66, %v70
    %v73 = vadd.f32 %v67, %v71
    %v74 = vmul.f32 %v64, %v72
    %v75 = vmul.f32 %v65, %v73
    %v76 = vlog2.pop %v58
    %v77 = vmul.f32 %v76, 0.6931472
    %v78 = vlog2.pop %v59
    %v79 = vmul.f32 %v78, 0.6931472
    %v80 = vmax.f32 %v77, -100.0
    %v81 = vmax.f32 %v79, -100.0
    %v82 = vsub.f32 1.0, %v58
    %v83 = vsub.f32 1.0, %v59
    %v84 = vlog2.pop %v82
    %v85 = vmul.f32 %v84, 0.6931472
    %v86 = vlog2.pop %v83
    %v87 = vmul.f32 %v86, 0.6931472
    %v88 = vmax.f32 %v85, -100.0
    %v89 = vmax.f32 %v87, -100.0
    %v90 = vmul.f32 %v60, %v80
    %v91 = vmul.f32 %v61, %v81
    %v92 = vmul.f32 %v68, %v88
    %v93 = vmul.f32 %v69, %v89
    %v94 = vadd.f32 %v90, %v92
    %v95 = vadd.f32 %v91, %v93
    %v96 = vsub.f32 0.0, %v94
    %v97 = vsub.f32 0.0, %v95
    %v98 = vmul.f32 %v74, %v96
    %v99 = vmul.f32 %v75, %v97
    %v100 = vadd.f32 %v98, %v99
    %v101 = vadd.f32 %v57, %v100
    %102 = vst [vmem:[#allocation7] sm:$0xff] %v101
    // Predicated region
    $region22: #{tpu_custom_call.1} parent=1 // pred_check
      _
    $region23: #{tpu_custom_call.1} parent=1 // pred_check_branch
      %104 = sbr.rel (0) target = $region25
    $region24: #{tpu_custom_call.1} parent=1 // pred_region
      %s106 = ssub.s32 128, 128
      %107 = vsyncadd [#allocation4], %s106
      %s109 = sshll.u32 [#allocation7], 4
      %s110 = int_to_ptr.vmem [resolvable:$true] %s109
      %112 = dma.vmem_to_hbm [thread:$0]  %s110, 128, %s2, [#allocation4]
    $region25: #{tpu_custom_call.1} parent=1 // pred_fallthru
      _
    // Predicated region
    $region26: #{tpu_custom_call.1} parent=1 // pred_check
      _
    $region27: #{tpu_custom_call.1} parent=1 // pred_check_branch
      %114 = sbr.rel (0) target = $region29
    $region28: #{tpu_custom_call.1} parent=1 // pred_region
      %115 = dma.done [#allocation4], 128
    $region29: #{tpu_custom_call.1} parent=1 // pred_fallthru
      _
    %116 = vsyncpa [#allocation3], 1
    %117 = vsyncpa [#allocation6], 1
    %118 = vsyncpa [#allocation4], 1

</llo_original>
